<compile_context>
chip_gen: v6e
topology: v6e:2x2x1
jax: 0.10.0
libtpu: 0.0.40
codegen_flags: <defaults>
</compile_context>

<pallas_src>
import jax
import jax.numpy as jnp
from jax.experimental import pallas as pl
from jax.experimental.pallas import tpu as pltpu


# --------------------------------------------------------------------------- #
# Kernel
# --------------------------------------------------------------------------- #
def lstm_disc_kernel(xproj_ref, whh_ref, wout_ref, bout_ref, out_ref,
                     h_scr, c_scr):
    """One grid step = one time chunk of the LSTM recurrence.

    xproj_ref: (T_CHUNK, B, 4H) bf16  x_t @ W_ih^T + (b_ih + b_hh), gates (i,f,g,o)
    whh_ref:   (H, 4H)          bf16  W_hh^T, gate-major columns
    wout_ref:  (1, H)           f32   Linear(H,1) weight row
    bout_ref:  (1, 1)           f32   Linear(H,1) bias (SMEM)
    out_ref:   (B, 1)           f32   discriminator score (written on last chunk)
    h_scr, c_scr: (B, H)        f32   hidden / cell state carried across chunks
    """
    chunk = pl.program_id(0)
    n_chunks = pl.num_programs(0)
    t_chunk, _, _ = xproj_ref.shape
    hidden = whh_ref.shape[0]

    @pl.when(chunk == 0)
    def _init():
        h_scr[...] = jnp.zeros_like(h_scr)
        c_scr[...] = jnp.zeros_like(c_scr)

    # Loop-invariant recurrent weight load, hoisted out of the time loop.
    w_hh = whh_ref[...]  # (H, 4H) bf16

    def step(t, carry):
        h, c = carry  # f32 (B, H)
        # Fused recurrent projection: one (B,H)@(H,4H) bf16 matmul, f32 accum,
        # plus the precomputed input projection (+ gate bias) for this timestep.
        gates = xproj_ref[t].astype(jnp.float32) + jnp.dot(
            h.astype(jnp.bfloat16), w_hh, preferred_element_type=jnp.float32)
        # Gate slices (i, f, g, o).  Lane-aligned when H % 128 == 0; for small
        # H these are intra-vreg lane selects (negligible at that size).
        i_g = jax.nn.sigmoid(gates[:, 0 * hidden:1 * hidden])
        f_g = jax.nn.sigmoid(gates[:, 1 * hidden:2 * hidden])
        g_g = jnp.tanh(gates[:, 2 * hidden:3 * hidden])
        o_g = jax.nn.sigmoid(gates[:, 3 * hidden:4 * hidden])
        c_new = f_g * c + i_g * g_g
        h_new = o_g * jnp.tanh(c_new)
        return h_new, c_new

    # Unroll factor scales down with the per-step live set to avoid vreg spills.
    if hidden <= 256:
        unroll = min(t_chunk, 8)
    elif hidden <= 512:
        unroll = min(t_chunk, 4)
    else:
        unroll = min(t_chunk, 2)

    h, c = jax.lax.fori_loop(0, t_chunk, step, (h_scr[...], c_scr[...]),
                             unroll=unroll)
    h_scr[...] = h
    c_scr[...] = c

    @pl.when(chunk == n_chunks - 1)
    def _finalize():
        # Final Linear(H, 1): VPU multiply + lane reduction (skip an N=1 MXU pass).
        hf = h_scr[...]
        out_ref[...] = (jnp.sum(hf * wout_ref[...], axis=-1, keepdims=True)
                        + bout_ref[0, 0])


# --------------------------------------------------------------------------- #
# Sizing helpers
# --------------------------------------------------------------------------- #
def _round_up(x, m):
    return ((x + m - 1) // m) * m


def _pick_time_chunk(seq_len, batch, hidden, slab_budget_bytes=24 << 20):
    """Largest divisor of seq_len whose double-buffered bf16 chunk fits the budget."""
    bytes_per_step = _round_up(batch, 16) * _round_up(4 * hidden, 128) * 2  # bf16
    target = max(1, slab_budget_bytes // (2 * bytes_per_step))
    target = int(min(target, seq_len, 512))
    chunk = 1
    for d in range(1, target + 1):
        if seq_len % d == 0:
            chunk = d
    return chunk


def _vmem_limit_bytes(time_chunk, batch, hidden):
    """Scoped-VMEM request sized to actual residency, capped for v7x's 64 MiB."""
    four_h = 4 * hidden
    xproj = time_chunk * _round_up(batch, 16) * _round_up(four_h, 128) * 2  # bf16
    w_hh = _round_up(hidden, 16) * _round_up(four_h, 128) * 2               # bf16
    w_out = 8 * _round_up(hidden, 128) * 4                                  # f32
    out = _round_up(batch, 8) * 128 * 4                                     # f32
    scratch = 2 * _round_up(batch, 8) * _round_up(hidden, 128) * 4          # f32
    total = 2 * (xproj + w_hh + w_out + out) + scratch   # 2x: pipeline double-buffers
    total = int(total * 1.5) + (4 << 20)                 # headroom for compiler scratch
    return min(total, 64 << 20)


# --------------------------------------------------------------------------- #
# Forward wrapper
# --------------------------------------------------------------------------- #
def discriminator_forward(x_tokens, params, time_chunk=None):
    """x_tokens: (batch, seq) int32 token ids. Returns (batch, 1) float32."""
    emb_table = params["embedding"]           # (vocab, E)
    w_ih_t = params["w_ih_t"]                 # (E, 4H) = W_ih^T, gate-major (i,f,g,o)
    w_hh_t = params["w_hh_t"]                 # (H, 4H) = W_hh^T
    b_gates = params["b_gates"]               # (1, 4H) = b_ih + b_hh
    w_out = params["w_out"]                   # (1, H)
    b_out = params["b_out"]                   # (1, 1)

    batch, seq_len = x_tokens.shape
    emb_size, four_h = w_ih_t.shape
    hidden = four_h // 4

    if time_chunk is None:
        time_chunk = _pick_time_chunk(seq_len, batch, hidden)
    if seq_len % time_chunk != 0:
        raise ValueError(f"time_chunk={time_chunk} must divide seq_len={seq_len}")
    n_chunks = seq_len // time_chunk

    # ---- XLA glue: the parallel, full-MXU-utilization part -----------------
    # Embedding lookup straight into time-major (S, B, E): transpose the tiny
    # int32 token matrix, not the big activation slab.  Dropout = identity (eval).
    embedded = jnp.take(emb_table, x_tokens.T, axis=0)            # (S, B, E)
    # Hoisted input projection with the gate bias folded in, in the matmul's
    # natural (S, B, 4H) output layout (no extra HBM transpose round trip).
    x_proj = jnp.einsum("sbe,eg->sbg", embedded, w_ih_t,
                        preferred_element_type=jnp.float32)       # (S, B, 4H)
    x_proj = (x_proj + b_gates[None]).astype(jnp.bfloat16)
    w_hh_b16 = w_hh_t.astype(jnp.bfloat16)                        # (H, 4H)

    # ---- Pallas: the serial recurrence, time-chunked + pipelined -----------
    out = pl.pallas_call(
        lstm_disc_kernel,
        out_shape=jax.ShapeDtypeStruct((batch, 1), jnp.float32),
        grid=(n_chunks,),
        in_specs=[
            # One time chunk per grid step; auto double-buffered by Pallas.
            pl.BlockSpec((time_chunk, batch, four_h), lambda s: (s, 0, 0)),
            # Constant blocks: fetched once, never re-DMA'd.
            pl.BlockSpec((hidden, four_h), lambda s: (0, 0)),
            pl.BlockSpec((1, hidden), lambda s: (0, 0)),
            pl.BlockSpec(memory_space=pltpu.MemorySpace.SMEM),    # scalar bias
        ],
        out_specs=pl.BlockSpec((batch, 1), lambda s: (0, 0)),
        scratch_shapes=[pltpu.VMEM((batch, hidden), jnp.float32),  # h carry
                        pltpu.VMEM((batch, hidden), jnp.float32)], # c carry
        compiler_params=pltpu.CompilerParams(
            dimension_semantics=("arbitrary",),
            vmem_limit_bytes=_vmem_limit_bytes(time_chunk, batch, hidden)),
    )(x_proj, w_hh_b16, w_out, b_out)
    return out


# --------------------------------------------------------------------------- #
# Params + pure-JAX reference
# --------------------------------------------------------------------------- #
def init_params(key, vocab_size, emb_size, hidden_size):
    """Deterministic, PyTorch-like uniform(-1/sqrt(H), 1/sqrt(H)) init."""
    k = jax.random.split(key, 7)
    bound = 1.0 / jnp.sqrt(jnp.float32(hidden_size))
    u = lambda kk, shape: jax.random.uniform(kk, shape, jnp.float32, -bound, bound)
    return {
        "embedding": jax.random.normal(k[0], (vocab_size, emb_size), jnp.float32),
        # Stored transposed so math is x @ W^T; 4H axis is gate-major (i,f,g,o).
        "w_ih_t": u(k[1], (emb_size, 4 * hidden_size)),
        "w_hh_t": u(k[2], (hidden_size, 4 * hidden_size)),
        "b_gates": u(k[3], (1, 4 * hidden_size)) + u(k[4], (1, 4 * hidden_size)),
        "w_out": u(k[5], (1, hidden_size)),
        "b_out": u(k[6], (1, 1)),
    }


def _reference_forward(x_tokens, params):
    """Pure-JAX f32 reference (same math as the PyTorch module)."""
    emb = jnp.take(params["embedding"], x_tokens, axis=0)
    emb = jnp.transpose(emb, (1, 0, 2))  # (S, B, E)
    B = x_tokens.shape[0]
    H = params["w_hh_t"].shape[0]
    h = jnp.zeros((B, H), jnp.float32)
    c = jnp.zeros((B, H), jnp.float32)

    def step(carry, x_t):
        h, c = carry
        gates = x_t @ params["w_ih_t"] + h @ params["w_hh_t"] + params["b_gates"]
        i = jax.nn.sigmoid(gates[:, 0:H])
        f = jax.nn.sigmoid(gates[:, H:2 * H])
        g = jnp.tanh(gates[:, 2 * H:3 * H])
        o = jax.nn.sigmoid(gates[:, 3 * H:4 * H])
        c = f * c + i * g
        h = o * jnp.tanh(c)
        return (h, c), None

    (h, c), _ = jax.lax.scan(step, (h, c), emb)
    return h @ params["w_out"].T + params["b_out"]


# --------------------------------------------------------------------------- #
if __name__ == "__main__":
    key = jax.random.PRNGKey(0)
    vocab_size = 16
    emb_size = 32
    hidden_size = 32
    batch = 2
    seq_len = 8

    pkey, xkey = jax.random.split(key)
    params = init_params(pkey, vocab_size, emb_size, hidden_size)
    x = jax.random.randint(xkey, (batch, seq_len), 0, vocab_size, dtype=jnp.int32)

    fwd = jax.jit(discriminator_forward, static_argnames=("time_chunk",))
    ref = jax.block_until_ready(_reference_forward(x, params))

    # Multi-chunk path (grid=(2,)): exercises the scratch-carried h/c pipeline.
    out_chunked = jax.block_until_ready(fwd(x, params, time_chunk=4))
    # Auto-picked chunk (single chunk at this tiny size).
    out_auto = jax.block_until_ready(fwd(x, params))

    assert out_chunked.shape == (batch, 1), out_chunked.shape
    # bf16 storage of x_proj / W_hh vs. the f32 reference -> loosened tolerance.
    assert jnp.allclose(out_chunked, ref, atol=2e-2, rtol=2e-2), (out_chunked, ref)
    assert jnp.allclose(out_auto, ref, atol=2e-2, rtol=2e-2), (out_auto, ref)
    assert jnp.allclose(out_chunked, out_auto, atol=1e-3, rtol=1e-3), (
        out_chunked, out_auto)

    print("KERNEL_OK")
</pallas_src>

<mosaic_0001>
module attributes {stable_mosaic.version = 11 : i64} {
  func.func @lstm_disc_kernel(%arg0: i32, %arg1: memref<4x2x128xbf16, #tpu.memory_space<vmem>>, %arg2: memref<32x128xbf16, #tpu.memory_space<vmem>>, %arg3: memref<1x32xf32, #tpu.memory_space<vmem>>, %arg4: memref<1x1xf32, #tpu.memory_space<smem>>, %arg5: memref<2x1xf32, #tpu.memory_space<vmem>>, %arg6: memref<2x32xf32, #tpu.memory_space<vmem>>, %arg7: memref<2x32xf32, #tpu.memory_space<vmem>>) attributes {dimension_semantics = [#tpu.dimension_semantics<arbitrary>], iteration_bounds = array<i64: 2>, scalar_prefetch = 0 : i64, scratch_operands = 2 : i64, tpu.core_type = #tpu.core_type<tc>, window_params = [{transform_indices = @transform_0, window_bounds = array<i64: 4, 2, 128>}, {pipeline_mode = #tpu.pipeline_mode<synchronous>, transform_indices = @transform_1, window_bounds = array<i64: 32, 128>}, {pipeline_mode = #tpu.pipeline_mode<synchronous>, transform_indices = @transform_2, window_bounds = array<i64: 1, 32>}, {transform_indices = @transform_3, window_bounds = array<i64: 1, 1>}, {pipeline_mode = #tpu.pipeline_mode<synchronous>, transform_indices = @transform_4, window_bounds = array<i64: 2, 1>}]} {
    %c0_i32 = arith.constant 0 : i32
    %0 = arith.cmpi eq, %arg0, %c0_i32 : i32
    %1 = arith.extui %0 : i1 to i32
    %c0_i32_0 = arith.constant 0 : i32
    %2 = arith.cmpi ne, %1, %c0_i32_0 : i32
    scf.if %2 {
      %cst_36 = arith.constant 0.000000e+00 : f32
      %139 = vector.broadcast %cst_36 : f32 to vector<2x32xf32>
      %c0_37 = arith.constant 0 : index
      %c0_38 = arith.constant 0 : index
      %140 = vector.load %arg6[%c0_37, %c0_38] : memref<2x32xf32, #tpu.memory_space<vmem>>, vector<2x32xf32>
      tpu.vector_store %arg6[%c0_37, %c0_38], %139 {strides = array<i32>} : memref<2x32xf32, #tpu.memory_space<vmem>>, vector<2x32xf32>,
      %cst_39 = arith.constant 0.000000e+00 : f32
      %141 = vector.broadcast %cst_39 : f32 to vector<2x32xf32>
      %c0_40 = arith.constant 0 : index
      %c0_41 = arith.constant 0 : index
      %142 = vector.load %arg7[%c0_40, %c0_41] : memref<2x32xf32, #tpu.memory_space<vmem>>, vector<2x32xf32>
      tpu.vector_store %arg7[%c0_40, %c0_41], %141 {strides = array<i32>} : memref<2x32xf32, #tpu.memory_space<vmem>>, vector<2x32xf32>,
    } else {
    }
    %c0 = arith.constant 0 : index
    %c0_1 = arith.constant 0 : index
    %3 = vector.load %arg2[%c0, %c0_1] : memref<32x128xbf16, #tpu.memory_space<vmem>>, vector<32x128xbf16>
    %c0_2 = arith.constant 0 : index
    %c0_3 = arith.constant 0 : index
    %4 = vector.load %arg6[%c0_2, %c0_3] : memref<2x32xf32, #tpu.memory_space<vmem>>, vector<2x32xf32>
    %c0_4 = arith.constant 0 : index
    %c0_5 = arith.constant 0 : index
    %5 = vector.load %arg7[%c0_4, %c0_5] : memref<2x32xf32, #tpu.memory_space<vmem>>, vector<2x32xf32>
    %c0_i32_6 = arith.constant 0 : i32
    %6 = arith.index_cast %c0_i32_6 : i32 to index
    %c0_7 = arith.constant 0 : index
    %c0_8 = arith.constant 0 : index
    %7 = vector.load %arg1[%6, %c0_7, %c0_8] : memref<4x2x128xbf16, #tpu.memory_space<vmem>>, vector<1x2x128xbf16>
    %8 = vector.shape_cast %7 : vector<1x2x128xbf16> to vector<2x128xbf16>
    %9 = arith.extf %8 : vector<2x128xbf16> to vector<2x128xf32>
    %10 = arith.truncf %4 : vector<2x32xf32> to vector<2x32xbf16>
    %cst = arith.constant dense<0.000000e+00> : vector<2x128xf32>
    %11 = tpu.matmul %10, %3, %cst {dimension_numbers = #tpu.dot_dimension_numbers<[1], [0], [0], [1], [0, 0, 1, 1], [], []>} : vector<2x32xbf16>, vector<32x128xbf16>, vector<2x128xf32> -> vector<2x128xf32>
    %12 = arith.addf %9, %11 : vector<2x128xf32>
    %13 = vector.extract_strided_slice %12 {offsets = [0, 0], sizes = [2, 32], strides = [1, 1]} : vector<2x128xf32> to vector<2x32xf32>
    %14 = arith.negf %13 : vector<2x32xf32>
    %15 = math.exp %14 : vector<2x32xf32>
    %cst_9 = arith.constant 1.000000e+00 : f32
    %16 = vector.broadcast %cst_9 : f32 to vector<2x32xf32>
    %17 = arith.addf %16, %15 : vector<2x32xf32>
    %18 = arith.divf %16, %17 : vector<2x32xf32>
    %19 = vector.extract_strided_slice %12 {offsets = [0, 32], sizes = [2, 32], strides = [1, 1]} : vector<2x128xf32> to vector<2x32xf32>
    %20 = arith.negf %19 : vector<2x32xf32>
    %21 = math.exp %20 : vector<2x32xf32>
    %cst_10 = arith.constant 1.000000e+00 : f32
    %22 = vector.broadcast %cst_10 : f32 to vector<2x32xf32>
    %23 = arith.addf %22, %21 : vector<2x32xf32>
    %24 = arith.divf %22, %23 : vector<2x32xf32>
    %25 = vector.extract_strided_slice %12 {offsets = [0, 64], sizes = [2, 32], strides = [1, 1]} : vector<2x128xf32> to vector<2x32xf32>
    %26 = math.tanh %25 : vector<2x32xf32>
    %27 = vector.extract_strided_slice %12 {offsets = [0, 96], sizes = [2, 32], strides = [1, 1]} : vector<2x128xf32> to vector<2x32xf32>
    %28 = arith.negf %27 : vector<2x32xf32>
    %29 = math.exp %28 : vector<2x32xf32>
    %cst_11 = arith.constant 1.000000e+00 : f32
    %30 = vector.broadcast %cst_11 : f32 to vector<2x32xf32>
    %31 = arith.addf %30, %29 : vector<2x32xf32>
    %32 = arith.divf %30, %31 : vector<2x32xf32>
    %33 = arith.mulf %24, %5 : vector<2x32xf32>
    %34 = arith.mulf %18, %26 : vector<2x32xf32>
    %35 = arith.addf %33, %34 : vector<2x32xf32>
    %36 = math.tanh %35 : vector<2x32xf32>
    %37 = arith.mulf %32, %36 : vector<2x32xf32>
    %c1_i32 = arith.constant 1 : i32
    %38 = arith.index_cast %c1_i32 : i32 to index
    %c0_12 = arith.constant 0 : index
    %c0_13 = arith.constant 0 : index
    %39 = vector.load %arg1[%38, %c0_12, %c0_13] : memref<4x2x128xbf16, #tpu.memory_space<vmem>>, vector<1x2x128xbf16>
    %40 = vector.shape_cast %39 : vector<1x2x128xbf16> to vector<2x128xbf16>
    %41 = arith.extf %40 : vector<2x128xbf16> to vector<2x128xf32>
    %42 = arith.truncf %37 : vector<2x32xf32> to vector<2x32xbf16>
    %cst_14 = arith.constant dense<0.000000e+00> : vector<2x128xf32>
    %43 = tpu.matmul %42, %3, %cst_14 {dimension_numbers = #tpu.dot_dimension_numbers<[1], [0], [0], [1], [0, 0, 1, 1], [], []>} : vector<2x32xbf16>, vector<32x128xbf16>, vector<2x128xf32> -> vector<2x128xf32>
    %44 = arith.addf %41, %43 : vector<2x128xf32>
    %45 = vector.extract_strided_slice %44 {offsets = [0, 0], sizes = [2, 32], strides = [1, 1]} : vector<2x128xf32> to vector<2x32xf32>
    %46 = arith.negf %45 : vector<2x32xf32>
    %47 = math.exp %46 : vector<2x32xf32>
    %cst_15 = arith.constant 1.000000e+00 : f32
    %48 = vector.broadcast %cst_15 : f32 to vector<2x32xf32>
    %49 = arith.addf %48, %47 : vector<2x32xf32>
    %50 = arith.divf %48, %49 : vector<2x32xf32>
    %51 = vector.extract_strided_slice %44 {offsets = [0, 32], sizes = [2, 32], strides = [1, 1]} : vector<2x128xf32> to vector<2x32xf32>
    %52 = arith.negf %51 : vector<2x32xf32>
    %53 = math.exp %52 : vector<2x32xf32>
    %cst_16 = arith.constant 1.000000e+00 : f32
    %54 = vector.broadcast %cst_16 : f32 to vector<2x32xf32>
    %55 = arith.addf %54, %53 : vector<2x32xf32>
    %56 = arith.divf %54, %55 : vector<2x32xf32>
    %57 = vector.extract_strided_slice %44 {offsets = [0, 64], sizes = [2, 32], strides = [1, 1]} : vector<2x128xf32> to vector<2x32xf32>
    %58 = math.tanh %57 : vector<2x32xf32>
    %59 = vector.extract_strided_slice %44 {offsets = [0, 96], sizes = [2, 32], strides = [1, 1]} : vector<2x128xf32> to vector<2x32xf32>
    %60 = arith.negf %59 : vector<2x32xf32>
    %61 = math.exp %60 : vector<2x32xf32>
    %cst_17 = arith.constant 1.000000e+00 : f32
    %62 = vector.broadcast %cst_17 : f32 to vector<2x32xf32>
    %63 = arith.addf %62, %61 : vector<2x32xf32>
    %64 = arith.divf %62, %63 : vector<2x32xf32>
    %65 = arith.mulf %56, %35 : vector<2x32xf32>
    %66 = arith.mulf %50, %58 : vector<2x32xf32>
    %67 = arith.addf %65, %66 : vector<2x32xf32>
    %68 = math.tanh %67 : vector<2x32xf32>
    %69 = arith.mulf %64, %68 : vector<2x32xf32>
    %c2_i32 = arith.constant 2 : i32
    %70 = arith.index_cast %c2_i32 : i32 to index
    %c0_18 = arith.constant 0 : index
    %c0_19 = arith.constant 0 : index
    %71 = vector.load %arg1[%70, %c0_18, %c0_19] : memref<4x2x128xbf16, #tpu.memory_space<vmem>>, vector<1x2x128xbf16>
    %72 = vector.shape_cast %71 : vector<1x2x128xbf16> to vector<2x128xbf16>
    %73 = arith.extf %72 : vector<2x128xbf16> to vector<2x128xf32>
    %74 = arith.truncf %69 : vector<2x32xf32> to vector<2x32xbf16>
    %cst_20 = arith.constant dense<0.000000e+00> : vector<2x128xf32>
    %75 = tpu.matmul %74, %3, %cst_20 {dimension_numbers = #tpu.dot_dimension_numbers<[1], [0], [0], [1], [0, 0, 1, 1], [], []>} : vector<2x32xbf16>, vector<32x128xbf16>, vector<2x128xf32> -> vector<2x128xf32>
    %76 = arith.addf %73, %75 : vector<2x128xf32>
    %77 = vector.extract_strided_slice %76 {offsets = [0, 0], sizes = [2, 32], strides = [1, 1]} : vector<2x128xf32> to vector<2x32xf32>
    %78 = arith.negf %77 : vector<2x32xf32>
    %79 = math.exp %78 : vector<2x32xf32>
    %cst_21 = arith.constant 1.000000e+00 : f32
    %80 = vector.broadcast %cst_21 : f32 to vector<2x32xf32>
    %81 = arith.addf %80, %79 : vector<2x32xf32>
    %82 = arith.divf %80, %81 : vector<2x32xf32>
    %83 = vector.extract_strided_slice %76 {offsets = [0, 32], sizes = [2, 32], strides = [1, 1]} : vector<2x128xf32> to vector<2x32xf32>
    %84 = arith.negf %83 : vector<2x32xf32>
    %85 = math.exp %84 : vector<2x32xf32>
    %cst_22 = arith.constant 1.000000e+00 : f32
    %86 = vector.broadcast %cst_22 : f32 to vector<2x32xf32>
    %87 = arith.addf %86, %85 : vector<2x32xf32>
    %88 = arith.divf %86, %87 : vector<2x32xf32>
    %89 = vector.extract_strided_slice %76 {offsets = [0, 64], sizes = [2, 32], strides = [1, 1]} : vector<2x128xf32> to vector<2x32xf32>
    %90 = math.tanh %89 : vector<2x32xf32>
    %91 = vector.extract_strided_slice %76 {offsets = [0, 96], sizes = [2, 32], strides = [1, 1]} : vector<2x128xf32> to vector<2x32xf32>
    %92 = arith.negf %91 : vector<2x32xf32>
    %93 = math.exp %92 : vector<2x32xf32>
    %cst_23 = arith.constant 1.000000e+00 : f32
    %94 = vector.broadcast %cst_23 : f32 to vector<2x32xf32>
    %95 = arith.addf %94, %93 : vector<2x32xf32>
    %96 = arith.divf %94, %95 : vector<2x32xf32>
    %97 = arith.mulf %88, %67 : vector<2x32xf32>
    %98 = arith.mulf %82, %90 : vector<2x32xf32>
    %99 = arith.addf %97, %98 : vector<2x32xf32>
    %100 = math.tanh %99 : vector<2x32xf32>
    %101 = arith.mulf %96, %100 : vector<2x32xf32>
    %c3_i32 = arith.constant 3 : i32
    %102 = arith.index_cast %c3_i32 : i32 to index
    %c0_24 = arith.constant 0 : index
    %c0_25 = arith.constant 0 : index
    %103 = vector.load %arg1[%102, %c0_24, %c0_25] : memref<4x2x128xbf16, #tpu.memory_space<vmem>>, vector<1x2x128xbf16>
    %104 = vector.shape_cast %103 : vector<1x2x128xbf16> to vector<2x128xbf16>
    %105 = arith.extf %104 : vector<2x128xbf16> to vector<2x128xf32>
    %106 = arith.truncf %101 : vector<2x32xf32> to vector<2x32xbf16>
    %cst_26 = arith.constant dense<0.000000e+00> : vector<2x128xf32>
    %107 = tpu.matmul %106, %3, %cst_26 {dimension_numbers = #tpu.dot_dimension_numbers<[1], [0], [0], [1], [0, 0, 1, 1], [], []>} : vector<2x32xbf16>, vector<32x128xbf16>, vector<2x128xf32> -> vector<2x128xf32>
    %108 = arith.addf %105, %107 : vector<2x128xf32>
    %109 = vector.extract_strided_slice %108 {offsets = [0, 0], sizes = [2, 32], strides = [1, 1]} : vector<2x128xf32> to vector<2x32xf32>
    %110 = arith.negf %109 : vector<2x32xf32>
    %111 = math.exp %110 : vector<2x32xf32>
    %cst_27 = arith.constant 1.000000e+00 : f32
    %112 = vector.broadcast %cst_27 : f32 to vector<2x32xf32>
    %113 = arith.addf %112, %111 : vector<2x32xf32>
    %114 = arith.divf %112, %113 : vector<2x32xf32>
    %115 = vector.extract_strided_slice %108 {offsets = [0, 32], sizes = [2, 32], strides = [1, 1]} : vector<2x128xf32> to vector<2x32xf32>
    %116 = arith.negf %115 : vector<2x32xf32>
    %117 = math.exp %116 : vector<2x32xf32>
    %cst_28 = arith.constant 1.000000e+00 : f32
    %118 = vector.broadcast %cst_28 : f32 to vector<2x32xf32>
    %119 = arith.addf %118, %117 : vector<2x32xf32>
    %120 = arith.divf %118, %119 : vector<2x32xf32>
    %121 = vector.extract_strided_slice %108 {offsets = [0, 64], sizes = [2, 32], strides = [1, 1]} : vector<2x128xf32> to vector<2x32xf32>
    %122 = math.tanh %121 : vector<2x32xf32>
    %123 = vector.extract_strided_slice %108 {offsets = [0, 96], sizes = [2, 32], strides = [1, 1]} : vector<2x128xf32> to vector<2x32xf32>
    %124 = arith.negf %123 : vector<2x32xf32>
    %125 = math.exp %124 : vector<2x32xf32>
    %cst_29 = arith.constant 1.000000e+00 : f32
    %126 = vector.broadcast %cst_29 : f32 to vector<2x32xf32>
    %127 = arith.addf %126, %125 : vector<2x32xf32>
    %128 = arith.divf %126, %127 : vector<2x32xf32>
    %129 = arith.mulf %120, %99 : vector<2x32xf32>
    %130 = arith.mulf %114, %122 : vector<2x32xf32>
    %131 = arith.addf %129, %130 : vector<2x32xf32>
    %132 = math.tanh %131 : vector<2x32xf32>
    %133 = arith.mulf %128, %132 : vector<2x32xf32>
    %c4_i32 = arith.constant 4 : i32
    %c0_30 = arith.constant 0 : index
    %c0_31 = arith.constant 0 : index
    %134 = vector.load %arg6[%c0_30, %c0_31] : memref<2x32xf32, #tpu.memory_space<vmem>>, vector<2x32xf32>
    tpu.vector_store %arg6[%c0_30, %c0_31], %133 {strides = array<i32>} : memref<2x32xf32, #tpu.memory_space<vmem>>, vector<2x32xf32>,
    %c0_32 = arith.constant 0 : index
    %c0_33 = arith.constant 0 : index
    %135 = vector.load %arg7[%c0_32, %c0_33] : memref<2x32xf32, #tpu.memory_space<vmem>>, vector<2x32xf32>
    tpu.vector_store %arg7[%c0_32, %c0_33], %131 {strides = array<i32>} : memref<2x32xf32, #tpu.memory_space<vmem>>, vector<2x32xf32>,
    %c1_i32_34 = arith.constant 1 : i32
    %136 = arith.cmpi eq, %arg0, %c1_i32_34 : i32
    %137 = arith.extui %136 : i1 to i32
    %c0_i32_35 = arith.constant 0 : i32
    %138 = arith.cmpi ne, %137, %c0_i32_35 : i32
    scf.if %138 {
      %c0_36 = arith.constant 0 : index
      %c0_37 = arith.constant 0 : index
      %139 = vector.load %arg6[%c0_36, %c0_37] : memref<2x32xf32, #tpu.memory_space<vmem>>, vector<2x32xf32>
      %c0_38 = arith.constant 0 : index
      %c0_39 = arith.constant 0 : index
      %140 = vector.load %arg3[%c0_38, %c0_39] : memref<1x32xf32, #tpu.memory_space<vmem>>, vector<1x32xf32>
      %141 = vector.broadcast %140 : vector<1x32xf32> to vector<2x32xf32>
      %142 = arith.mulf %139, %141 : vector<2x32xf32>
      %cst_40 = arith.constant dense<0.000000e+00> : vector<2xf32>
      %143 = vector.multi_reduction <add>, %142, %cst_40 [1] : vector<2x32xf32> to vector<2xf32>
      %144 = vector.shape_cast %143 : vector<2xf32> to vector<2x1xf32>
      %c0_41 = arith.constant 0 : index
      %c0_42 = arith.constant 0 : index
      %145 = memref.load %arg4[%c0_41, %c0_42] : memref<1x1xf32, #tpu.memory_space<smem>>
      %146 = vector.broadcast %145 : f32 to vector<2x1xf32>
      %147 = arith.addf %144, %146 : vector<2x1xf32>
      %c0_43 = arith.constant 0 : index
      %c0_44 = arith.constant 0 : index
      %148 = vector.load %arg5[%c0_43, %c0_44] : memref<2x1xf32, #tpu.memory_space<vmem>>, vector<2x1xf32>
      tpu.vector_store %arg5[%c0_43, %c0_44], %147 {strides = array<i32>} : memref<2x1xf32, #tpu.memory_space<vmem>>, vector<2x1xf32>,
    } else {
    }
    return
  }
  func.func @transform_0(%arg0: i32) -> (i32, i32, i32) {
    %c0_i32 = arith.constant 0 : i32
    %c0_i32_0 = arith.constant 0 : i32
    %c0_i32_1 = arith.constant 0 : i32
    return %arg0, %c0_i32, %c0_i32_0 : i32, i32, i32
  }
  func.func @transform_1(%arg0: i32) -> (i32, i32) {
    %c0_i32 = arith.constant 0 : i32
    %c0_i32_0 = arith.constant 0 : i32
    %c0_i32_1 = arith.constant 0 : i32
    return %c0_i32, %c0_i32_0 : i32, i32
  }
  func.func @transform_2(%arg0: i32) -> (i32, i32) {
    %c0_i32 = arith.constant 0 : i32
    %c0_i32_0 = arith.constant 0 : i32
    %c0_i32_1 = arith.constant 0 : i32
    return %c0_i32, %c0_i32_0 : i32, i32
  }
  func.func @transform_3(%arg0: i32) -> (i32, i32) {
    %c0_i32 = arith.constant 0 : i32
    %c0_i32_0 = arith.constant 0 : i32
    %c0_i32_1 = arith.constant 0 : i32
    return %c0_i32, %c0_i32_0 : i32, i32
  }
  func.func @transform_4(%arg0: i32) -> (i32, i32) {
    %c0_i32 = arith.constant 0 : i32
    %c0_i32_0 = arith.constant 0 : i32
    %c0_i32_1 = arith.constant 0 : i32
    return %c0_i32, %c0_i32_0 : i32, i32
  }
}

</mosaic_0001>

<llo_original>
// kernel: discriminator_forward.1
$region0: #{discriminator_forward.1}
  #allocation0 [shape = 'u32[]', space=smem, size = 0x4, offset = 0x4, fixed_abs, tag = 'smem constant byte address 0x4 - core index']
  #allocation1 [shape = 'u32[144,128]{1,0:T(1,128)}', space=vmem, size = 0x12000, scoped, tag = 'internal scratch']
  #allocation2 [shape = 'f32[2,32]{1,0:T(2,128)}', space=vmem, size = 0x400, scoped, tag = 'scratch operand']
  #allocation3 [shape = 'f32[2,32]{1,0:T(2,128)}', space=vmem, size = 0x400, scoped, tag = 'scratch operand']
  #allocation4 [shape = 'f32[1,1]{1,0:T(1,128)S(6)}', space=smem, size = 0x200, scoped, tag = 'scoped memory for discriminator_forward.1']
  %s0 = inlined_call_operand.vmem [shape: bf16[8,2,128], index: 0, kind: input, shape index: {}]
  %s1 = inlined_call_operand.vmem [shape: bf16[32,128], index: 1, kind: input, shape index: {}]
  %s2 = inlined_call_operand.vmem [shape: f32[1,32], index: 2, kind: input, shape index: {}]
  %s3 = inlined_call_operand.<no memory space> [shape: f32[1,1], index: 3, kind: input, shape index: {}]
  %s4 = inlined_call_operand.vmem [shape: f32[2,1], index: 4, kind: output, shape index: {}]
  %s5 = sld [smem:[#allocation0]]
  $region57: #{discriminator_forward.1} parent=0
    _
  %s7 = ssub.s32 1, %s5
  %s8 = scalar_select 0, %s7, %s5
  %9 = sst [smem:[#allocation4]] %s3
  loop: start=0, step=1, limit=4
  $region2: #{discriminator_forward.1} parent=0 // loop_pre_header
    _
  $region3: #{discriminator_forward.1} parent=0 // loop_header
    %s11 = sphi 0, %s15
    %p12 = scmp.ge.s32.totalorder %s11, 4
    %s21 = sphi 0, %s23
    %s24 = sphi 0, %s21
    %s25 = sphi 0, %s24
    %s41 = sphi 0, %s25
    %s45 = sphi 0, %s45
    %s47 = sphi 0, %s45
    %s48 = sphi 0, %s47
    %s62 = sphi 0, %s48
    %s66 = sphi 0, %s66
    %s68 = sphi 0, %s66
    %s69 = sphi 0, %s68
    %s83 = sphi 0, %s69
    %s87 = sphi 0, %s87
    %s89 = sphi 0, %s87
    %s90 = sphi 0, %s89
    %s104 = sphi 0, %s90
    %s108 = sphi 0, %s108
    %s110 = sphi 0, %s108
    %s111 = sphi 0, %s110
    %s125 = sphi 0, %s111
  $region4: #{discriminator_forward.1} parent=0 // loop_header_branch
    %14 = sbr.rel (%p12) target = $region8
  $region5: #{discriminator_forward.1} parent=0 // loop_body
    %s16 = ssub.s32 %s11, 1
    %s17 = ssub.s32 %s11, 2
    %s18 = sadd.s32 %s11, 1
    %s19 = ssub.s32 %s11, %s18
    %p20 = scmp.eq.s32.totalorder %s19, 0
    %s22 = sadd.s32 %s21, 1
    %s23 = scalar_select %p20, %s21, %s22
    %p26 = pneg %p20
    %p27 = scmp.eq.s32.totalorder %s11, 1
    %p28 = por %p26, %p27
    %p29 = scmp.ne.s32.totalorder %s21, %s24
    %p30 = scmp.eq.s32.totalorder %s11, 0
    %p31 = por %p29, %p30
    %p32 = scmp.ne.s32.totalorder %s21, %s24
    %p33 = scmp.eq.s32.totalorder %s16, 1
    %p34 = por %p32, %p33
    %p35 = scmp.ne.s32.totalorder %s24, %s25
    %p36 = scmp.eq.s32.totalorder %s16, 0
    %p37 = por %p35, %p36
    %p38 = scmp.ne.s32.totalorder %s24, %s25
    %p39 = scmp.eq.s32.totalorder %s17, 1
    %p40 = por %p38, %p39
    %p42 = scmp.ne.s32.totalorder %s25, %s41
    %p43 = scmp.eq.s32.totalorder %s17, 0
    %p44 = por %p42, %p43
    %s46 = sadd.s32 %s45, 1
    %p49 = scmp.eq.s32.totalorder %s11, 1
    %p50 = scmp.ne.s32.totalorder %s45, %s47
    %p51 = scmp.eq.s32.totalorder %s11, 0
    %p52 = por %p50, %p51
    %p53 = scmp.ne.s32.totalorder %s45, %s47
    %p54 = scmp.eq.s32.totalorder %s16, 1
    %p55 = por %p53, %p54
    %p56 = scmp.ne.s32.totalorder %s47, %s48
    %p57 = scmp.eq.s32.totalorder %s16, 0
    %p58 = por %p56, %p57
    %p59 = scmp.ne.s32.totalorder %s47, %s48
    %p60 = scmp.eq.s32.totalorder %s17, 1
    %p61 = por %p59, %p60
    %p63 = scmp.ne.s32.totalorder %s48, %s62
    %p64 = scmp.eq.s32.totalorder %s17, 0
    %p65 = por %p63, %p64
    %s67 = sadd.s32 %s66, 1
    %p70 = scmp.eq.s32.totalorder %s11, 1
    %p71 = scmp.ne.s32.totalorder %s66, %s68
    %p72 = scmp.eq.s32.totalorder %s11, 0
    %p73 = por %p71, %p72
    %p74 = scmp.ne.s32.totalorder %s66, %s68
    %p75 = scmp.eq.s32.totalorder %s16, 1
    %p76 = por %p74, %p75
    %p77 = scmp.ne.s32.totalorder %s68, %s69
    %p78 = scmp.eq.s32.totalorder %s16, 0
    %p79 = por %p77, %p78
    %p80 = scmp.ne.s32.totalorder %s68, %s69
    %p81 = scmp.eq.s32.totalorder %s17, 1
    %p82 = por %p80, %p81
    %p84 = scmp.ne.s32.totalorder %s69, %s83
    %p85 = scmp.eq.s32.totalorder %s17, 0
    %p86 = por %p84, %p85
    %s88 = sadd.s32 %s87, 1
    %p91 = scmp.eq.s32.totalorder %s11, 1
    %p92 = scmp.ne.s32.totalorder %s87, %s89
    %p93 = scmp.eq.s32.totalorder %s11, 0
    %p94 = por %p92, %p93
    %p95 = scmp.ne.s32.totalorder %s87, %s89
    %p96 = scmp.eq.s32.totalorder %s16, 1
    %p97 = por %p95, %p96
    %p98 = scmp.ne.s32.totalorder %s89, %s90
    %p99 = scmp.eq.s32.totalorder %s16, 0
    %p100 = por %p98, %p99
    %p101 = scmp.ne.s32.totalorder %s89, %s90
    %p102 = scmp.eq.s32.totalorder %s17, 1
    %p103 = por %p101, %p102
    %p105 = scmp.ne.s32.totalorder %s90, %s104
    %p106 = scmp.eq.s32.totalorder %s17, 0
    %p107 = por %p105, %p106
    %s109 = sadd.s32 %s108, 1
    %p112 = scmp.eq.s32.totalorder %s11, 1
    %p113 = scmp.ne.s32.totalorder %s108, %s110
    %p114 = scmp.eq.s32.totalorder %s11, 0
    %p115 = por %p113, %p114
    %p116 = scmp.ne.s32.totalorder %s108, %s110
    %p117 = scmp.eq.s32.totalorder %s16, 1
    %p118 = por %p116, %p117
    %p119 = scmp.ne.s32.totalorder %s110, %s111
    %p120 = scmp.eq.s32.totalorder %s16, 0
    %p121 = por %p119, %p120
    %p122 = scmp.ne.s32.totalorder %s110, %s111
    %p123 = scmp.eq.s32.totalorder %s17, 1
    %p124 = por %p122, %p123
    %p126 = scmp.ne.s32.totalorder %s111, %s125
    %p127 = scmp.eq.s32.totalorder %s17, 0
    %p128 = por %p126, %p127
    %p129 = scmp.le.s32.totalorder 1, %s11
    %p130 = scmp.lt.s32.totalorder %s11, 3
    %p131 = pnand %p129, %p130
    %p132 = pneg %p131
    // Predicated region
    $region9: #{discriminator_forward.1} parent=5 // pred_check
      _
    $region10: #{discriminator_forward.1} parent=5 // pred_check_branch
      %134 = sbr.rel (%p131) target = $region12
    $region11: #{discriminator_forward.1} parent=5 // pred_region
      %s135 = ssub.s32 %s11, 1
      // Predicated region
      $region13: #{discriminator_forward.1} parent=11 // pred_check
        %p136 = pneg %p58
      $region14: #{discriminator_forward.1} parent=11 // pred_check_branch
        %138 = sbr.rel (%p136) target = $region16
      $region15: #{discriminator_forward.1} parent=11 // pred_region
        _
      $region16: #{discriminator_forward.1} parent=11 // pred_fallthru
        _
      // Predicated region
      $region17: #{discriminator_forward.1} parent=11 // pred_check
        %p139 = pneg %p79
      $region18: #{discriminator_forward.1} parent=11 // pred_check_branch
        %141 = sbr.rel (%p139) target = $region20
      $region19: #{discriminator_forward.1} parent=11 // pred_region
        _
      $region20: #{discriminator_forward.1} parent=11 // pred_fallthru
        _
      // Predicated region
      $region21: #{discriminator_forward.1} parent=11 // pred_check
        %p142 = pneg %p100
      $region22: #{discriminator_forward.1} parent=11 // pred_check_branch
        %144 = sbr.rel (%p142) target = $region24
      $region23: #{discriminator_forward.1} parent=11 // pred_region
        _
      $region24: #{discriminator_forward.1} parent=11 // pred_fallthru
        _
    $region12: #{discriminator_forward.1} parent=5 // pred_fallthru
      _
    %p145 = scmp.lt.s32.totalorder %s11, 2
    // Predicated region
    $region25: #{discriminator_forward.1} parent=5 // pred_check
      %p146 = pneg %p145
    $region26: #{discriminator_forward.1} parent=5 // pred_check_branch
      %148 = sbr.rel (%p146) target = $region28
    $region27: #{discriminator_forward.1} parent=5 // pred_region
      // Predicated region
      $region29: #{discriminator_forward.1} parent=27 // pred_check
        %p149 = pneg %p31
      $region30: #{discriminator_forward.1} parent=27 // pred_check_branch
        %151 = sbr.rel (%p149) target = $region32
      $region31: #{discriminator_forward.1} parent=27 // pred_region
        %s152 = smul.u32 4, %s11
        %p153 = scmp.lt.s32.totalorder %s152, 7
        %s154 = scalar_select %p153, %s152, 7
        %s155 = scalar_lea.vmem %s0, %s154
        %s156 = smul.u32 4, %s11
      $region32: #{discriminator_forward.1} parent=27 // pred_fallthru
        _
    $region28: #{discriminator_forward.1} parent=5 // pred_fallthru
      _
    %p157 = scmp.le.s32.totalorder 1, %s11
    %p158 = scmp.lt.s32.totalorder %s11, 3
    %p159 = pnand %p157, %p158
    %p160 = pneg %p159
    // Predicated region
    $region33: #{discriminator_forward.1} parent=5 // pred_check
      _
    $region34: #{discriminator_forward.1} parent=5 // pred_check_branch
      %162 = sbr.rel (%p159) target = $region36
    $region35: #{discriminator_forward.1} parent=5 // pred_region
      %s163 = ssub.s32 %s11, 1
      %s164 = smul.u32 4, %s16
      %p165 = scmp.lt.s32.totalorder %s164, 7
      %s166 = scalar_select %p165, %s164, 7
      %s167 = scalar_lea.vmem %s0, %s166
      %p168 = pneg %p37
      %p169 = pneg %p34
      %p170 = pneg %p58
      %p171 = pneg %p55
      %p172 = pneg %p79
      %p173 = pneg %p76
      %p174 = pneg %p100
      %p175 = pneg %p97
      %p176 = pneg %p121
      %p177 = pneg %p118
      %s178 = smul.u32 4, %s16
      %p179 = scmp.lt.s32.totalorder %s178, 7
      %s180 = scalar_select %p179, %s178, 7
      %s181 = scalar_lea.vmem %s0, %s180
      %s182 = smul.u32 4, %s16
      %p184 = scmp.eq.s32.totalorder %s16, 0
      // Predicated region
      $region37: #{discriminator_forward.1} parent=35 // pred_check
        %p185 = pneg %p184
      $region38: #{discriminator_forward.1} parent=35 // pred_check_branch
        %187 = sbr.rel (%p185) target = $region40
      $region39: #{discriminator_forward.1} parent=35 // pred_region
        %vm188 = vcmask 254976
        %189 = vst.msk [vmem:[#allocation2] sm:$0x3] %vm188, 0.0
        %190 = vst.msk [vmem:[#allocation3] sm:$0x3] %vm188, 0.0
      $region40: #{discriminator_forward.1} parent=35 // pred_fallthru
        _
      %v191 = vld [vmem:[%s1] sm:$0xf]
      %v192 = vld [vmem:[%s1 + $0x4] sm:$0xf]
      %v193 = vld [vmem:[%s1 + $0x8] sm:$0xf]
      %v194 = vld [vmem:[%s1 + $0xc] sm:$0xf]
      %v195 = vld [vmem:[#allocation2] sm:$0x3]
      %v196 = vld [vmem:[#allocation3] sm:$0x3]
      %v197 = vld [vmem:[%s181] sm:$0x1]
      %v198 = vunpack.c.l.bf16 %v197
      %v199 = vpack.c.bf16 %v195, %v195
      %v204 = vunpack.c.l.b16 %v191
      %v205 = vunpack.c.l.b16 %v192
      %v206 = vunpack.c.l.b16 %v193
      %v207 = vunpack.c.l.b16 %v194
      %v208 = vpack.c.b16 %v205, %v204
      %v209 = vpack.c.b16 %v207, %v206
      %vm212 = vcmask 261120
      %v214 = vsel %vm212, %v199, 0
      %216 = vmatprep.subr.bf16.mxu0 0
      %217 = vmatpush1.bf16.msra.mxu0 0
      %218 = vmatprep.subr.bf16.mxu0 0
      %219 = vmatpush1.bf16.msra.mxu0 0
      %220 = vmatprep.subr.bf16.mxu0 0
      %221 = vmatpush1.bf16.msra.mxu0 0
      %222 = vmatprep.subr.bf16.mxu0 0
      %223 = vmatpush1.bf16.msra.mxu0 0
      %224 = vmatprep.subr.bf16.mxu0 0
      %225 = vmatpush1.bf16.msra.mxu0 0
      %226 = vmatprep.subr.bf16.mxu0 0
      %227 = vmatpush1.bf16.msra.mxu0 0
      %228 = vmatprep.subr.bf16.mxu0 0
      %229 = vmatpush1.bf16.msra.mxu0 %v209
      %230 = vmatprep.subr.bf16.mxu0 0
      %231 = vmatpush1.bf16.msra.mxu0 %v208
      %232 = vmatprep.subr.bf16.mxu0 0
      %233 = vmatpush2.bf16.msra.mxu0 0
      %234 = vmatprep.subr.bf16.mxu0 0
      %235 = vmatpush2.bf16.msra.mxu0 0
      %236 = vmatprep.subr.bf16.mxu0 0
      %237 = vmatpush2.bf16.msra.mxu0 0
      %238 = vmatprep.subr.bf16.mxu0 0
      %239 = vmatpush2.bf16.msra.mxu0 0
      %240 = vmatprep.subr.bf16.mxu0 0
      %241 = vmatpush2.bf16.msra.mxu0 0
      %242 = vmatprep.subr.bf16.mxu0 0
      %243 = vmatpush2.bf16.msra.mxu0 0
      %244 = vmatprep.subr.bf16.mxu0 0
      %245 = vmatpush2.bf16.msra.mxu0 0
      %246 = vmatprep.subr.bf16.mxu0 0
      %247 = vmatpush2.bf16.msra.mxu0 0
      %248 = vmatprep.mubr.bf16.mxu0 0
      %249 = vmatmul.mubr.bf16.gmra.mxu0 %v214
      %v250 = vpop.f32.mrf.mxu0
      %v251 = vadd.f32 0.0, %v250
      %v252 = vpop.f32.mrf.mxu0
      %v253 = vpop.f32.mrf.mxu0
      %v254 = vpop.f32.mrf.mxu0
      %255 = vdwg.mxu0
      %v256 = vadd.f32 %v198, %v251
      %v257 = vxor.u32 %v256, 2147483648
      %v258 = vmul.f32 %v257, 1.442695
      %v259 = vpow.pop %v258
      %v260 = vadd.f32 %v259, 1.0
      %v261 = vrcp.pop %v260
      %v262 = vmul.f32 1.0, %v261
      %v263 = vtanh.pop %v256
      %v266 = vunpack.c.l.s4 1983009808
      %v267 = vunpack.c.0.s8 %v266
      %v268 = vlaneseq
      %v269 = vshrl.u32 %v268, 7
      %v270 = vsub.s32 %v267, %v269
      %v271 = vrot.slane %v196, %v270
      %272 = vrot.lane.b32.xlu0 %v271, 32
      %v273 = vpop.permute.xlu0 %272
      %v275 = vmul.f32 %v262, %v273
      %277 = vrot.lane.b32.xlu0 %v263, 64
      %v278 = vpop.permute.xlu0 %277
      %v280 = vmul.f32 %v262, %v278
      %282 = vrot.lane.b32.xlu0 %v280, 32
      %v283 = vpop.permute.xlu0 %282
      %v285 = vadd.f32 %v275, %v283
      %v286 = vtanh.pop %v285
      %288 = vrot.lane.b32.xlu0 %v286, 64
      %v289 = vpop.permute.xlu0 %288
      %v291 = vmul.f32 %v262, %v289
      %s292 = scalar_lea.vmem %s181, 1
      %v293 = vld [vmem:[%s292] sm:$0x1]
      %v294 = vunpack.c.l.bf16 %v293
      %v295 = vpack.c.bf16 %v291, %v291
      %297 = vrot.lane.b32.xlu0 %v295, 32
      %v298 = vpop.permute.xlu0 %297
      %v300 = vsel %vm212, %v298, 0
      %302 = vmatprep.subr.bf16.mxu0 0
      %303 = vmatpush1.bf16.msra.mxu0 0
      %304 = vmatprep.subr.bf16.mxu0 0
      %305 = vmatpush1.bf16.msra.mxu0 0
      %306 = vmatprep.subr.bf16.mxu0 0
      %307 = vmatpush1.bf16.msra.mxu0 0
      %308 = vmatprep.subr.bf16.mxu0 0
      %309 = vmatpush1.bf16.msra.mxu0 0
      %310 = vmatprep.subr.bf16.mxu0 0
      %311 = vmatpush1.bf16.msra.mxu0 0
      %312 = vmatprep.subr.bf16.mxu0 0
      %313 = vmatpush1.bf16.msra.mxu0 0
      %314 = vmatprep.subr.bf16.mxu0 0
      %315 = vmatpush1.bf16.msra.mxu0 %v209
      %316 = vmatprep.subr.bf16.mxu0 0
      %317 = vmatpush1.bf16.msra.mxu0 %v208
      %318 = vmatprep.subr.bf16.mxu0 0
      %319 = vmatpush2.bf16.msra.mxu0 0
      %320 = vmatprep.subr.bf16.mxu0 0
      %321 = vmatpush2.bf16.msra.mxu0 0
      %322 = vmatprep.subr.bf16.mxu0 0
      %323 = vmatpush2.bf16.msra.mxu0 0
      %324 = vmatprep.subr.bf16.mxu0 0
      %325 = vmatpush2.bf16.msra.mxu0 0
      %326 = vmatprep.subr.bf16.mxu0 0
      %327 = vmatpush2.bf16.msra.mxu0 0
      %328 = vmatprep.subr.bf16.mxu0 0
      %329 = vmatpush2.bf16.msra.mxu0 0
      %330 = vmatprep.subr.bf16.mxu0 0
      %331 = vmatpush2.bf16.msra.mxu0 0
      %332 = vmatprep.subr.bf16.mxu0 0
      %333 = vmatpush2.bf16.msra.mxu0 0
      %334 = vmatprep.mubr.bf16.mxu0 0
      %335 = vmatmul.mubr.bf16.gmra.mxu0 %v300
      %v336 = vpop.f32.mrf.mxu0
      %v337 = vadd.f32 0.0, %v336
      %v338 = vpop.f32.mrf.mxu0
      %v339 = vpop.f32.mrf.mxu0
      %v340 = vpop.f32.mrf.mxu0
      %341 = vdwg.mxu0
      %v342 = vadd.f32 %v294, %v337
      %v343 = vxor.u32 %v342, 2147483648
      %v344 = vmul.f32 %v343, 1.442695
      %v345 = vpow.pop %v344
      %v346 = vadd.f32 %v345, 1.0
      %v347 = vrcp.pop %v346
      %v348 = vmul.f32 1.0, %v347
      %v349 = vtanh.pop %v342
      %v350 = vmul.f32 %v348, %v285
      %352 = vrot.lane.b32.xlu0 %v349, 64
      %v353 = vpop.permute.xlu0 %352
      %v355 = vmul.f32 %v348, %v353
      %357 = vrot.lane.b32.xlu0 %v355, 32
      %v358 = vpop.permute.xlu0 %357
      %v360 = vadd.f32 %v350, %v358
      %v361 = vtanh.pop %v360
      %363 = vrot.lane.b32.xlu0 %v361, 64
      %v364 = vpop.permute.xlu0 %363
      %v366 = vmul.f32 %v348, %v364
      %s367 = scalar_lea.vmem %s181, 2
      %v368 = vld [vmem:[%s367] sm:$0x1]
      %v369 = vunpack.c.l.bf16 %v368
      %v370 = vpack.c.bf16 %v366, %v366
      %372 = vrot.lane.b32.xlu0 %v370, 32
      %v373 = vpop.permute.xlu0 %372
      %v375 = vsel %vm212, %v373, 0
      %377 = vmatprep.subr.bf16.mxu0 0
      %378 = vmatpush1.bf16.msra.mxu0 0
      %379 = vmatprep.subr.bf16.mxu0 0
      %380 = vmatpush1.bf16.msra.mxu0 0
      %381 = vmatprep.subr.bf16.mxu0 0
      %382 = vmatpush1.bf16.msra.mxu0 0
      %383 = vmatprep.subr.bf16.mxu0 0
      %384 = vmatpush1.bf16.msra.mxu0 0
      %385 = vmatprep.subr.bf16.mxu0 0
      %386 = vmatpush1.bf16.msra.mxu0 0
      %387 = vmatprep.subr.bf16.mxu0 0
      %388 = vmatpush1.bf16.msra.mxu0 0
      %389 = vmatprep.subr.bf16.mxu0 0
      %390 = vmatpush1.bf16.msra.mxu0 %v209
      %391 = vmatprep.subr.bf16.mxu0 0
      %392 = vmatpush1.bf16.msra.mxu0 %v208
      %393 = vmatprep.subr.bf16.mxu0 0
      %394 = vmatpush2.bf16.msra.mxu0 0
      %395 = vmatprep.subr.bf16.mxu0 0
      %396 = vmatpush2.bf16.msra.mxu0 0
      %397 = vmatprep.subr.bf16.mxu0 0
      %398 = vmatpush2.bf16.msra.mxu0 0
      %399 = vmatprep.subr.bf16.mxu0 0
      %400 = vmatpush2.bf16.msra.mxu0 0
      %401 = vmatprep.subr.bf16.mxu0 0
      %402 = vmatpush2.bf16.msra.mxu0 0
      %403 = vmatprep.subr.bf16.mxu0 0
      %404 = vmatpush2.bf16.msra.mxu0 0
      %405 = vmatprep.subr.bf16.mxu0 0
      %406 = vmatpush2.bf16.msra.mxu0 0
      %407 = vmatprep.subr.bf16.mxu0 0
      %408 = vmatpush2.bf16.msra.mxu0 0
      %409 = vmatprep.mubr.bf16.mxu0 0
      %410 = vmatmul.mubr.bf16.gmra.mxu0 %v375
      %v411 = vpop.f32.mrf.mxu0
      %v412 = vadd.f32 0.0, %v411
      %v413 = vpop.f32.mrf.mxu0
      %v414 = vpop.f32.mrf.mxu0
      %v415 = vpop.f32.mrf.mxu0
      %416 = vdwg.mxu0
      %v417 = vadd.f32 %v369, %v412
      %v418 = vxor.u32 %v417, 2147483648
      %v419 = vmul.f32 %v418, 1.442695
      %v420 = vpow.pop %v419
      %v421 = vadd.f32 %v420, 1.0
      %v422 = vrcp.pop %v421
      %v423 = vmul.f32 1.0, %v422
      %v424 = vtanh.pop %v417
      %v425 = vmul.f32 %v423, %v360
      %427 = vrot.lane.b32.xlu0 %v424, 64
      %v428 = vpop.permute.xlu0 %427
      %v430 = vmul.f32 %v423, %v428
      %432 = vrot.lane.b32.xlu0 %v430, 32
      %v433 = vpop.permute.xlu0 %432
      %v435 = vadd.f32 %v425, %v433
      %v436 = vtanh.pop %v435
      %438 = vrot.lane.b32.xlu0 %v436, 64
      %v439 = vpop.permute.xlu0 %438
      %v441 = vmul.f32 %v423, %v439
      %s442 = scalar_lea.vmem %s181, 3
      %v443 = vld [vmem:[%s442] sm:$0x1]
      %v444 = vunpack.c.l.bf16 %v443
      %v445 = vpack.c.bf16 %v441, %v441
      %447 = vrot.lane.b32.xlu0 %v445, 32
      %v448 = vpop.permute.xlu0 %447
      %v450 = vsel %vm212, %v448, 0
      %452 = vmatprep.subr.bf16.mxu0 0
      %453 = vmatpush1.bf16.msra.mxu0 0
      %454 = vmatprep.subr.bf16.mxu0 0
      %455 = vmatpush1.bf16.msra.mxu0 0
      %456 = vmatprep.subr.bf16.mxu0 0
      %457 = vmatpush1.bf16.msra.mxu0 0
      %458 = vmatprep.subr.bf16.mxu0 0
      %459 = vmatpush1.bf16.msra.mxu0 0
      %460 = vmatprep.subr.bf16.mxu0 0
      %461 = vmatpush1.bf16.msra.mxu0 0
      %462 = vmatprep.subr.bf16.mxu0 0
      %463 = vmatpush1.bf16.msra.mxu0 0
      %464 = vmatprep.subr.bf16.mxu0 0
      %465 = vmatpush1.bf16.msra.mxu0 %v209
      %466 = vmatprep.subr.bf16.mxu0 0
      %467 = vmatpush1.bf16.msra.mxu0 %v208
      %468 = vmatprep.subr.bf16.mxu0 0
      %469 = vmatpush2.bf16.msra.mxu0 0
      %470 = vmatprep.subr.bf16.mxu0 0
      %471 = vmatpush2.bf16.msra.mxu0 0
      %472 = vmatprep.subr.bf16.mxu0 0
      %473 = vmatpush2.bf16.msra.mxu0 0
      %474 = vmatprep.subr.bf16.mxu0 0
      %475 = vmatpush2.bf16.msra.mxu0 0
      %476 = vmatprep.subr.bf16.mxu0 0
      %477 = vmatpush2.bf16.msra.mxu0 0
      %478 = vmatprep.subr.bf16.mxu0 0
      %479 = vmatpush2.bf16.msra.mxu0 0
      %480 = vmatprep.subr.bf16.mxu0 0
      %481 = vmatpush2.bf16.msra.mxu0 0
      %482 = vmatprep.subr.bf16.mxu0 0
      %483 = vmatpush2.bf16.msra.mxu0 0
      %484 = vmatprep.mubr.bf16.mxu0 0
      %485 = vmatmul.mubr.bf16.gmra.mxu0 %v450
      %v486 = vpop.f32.mrf.mxu0
      %v487 = vadd.f32 0.0, %v486
      %v488 = vpop.f32.mrf.mxu0
      %v489 = vpop.f32.mrf.mxu0
      %v490 = vpop.f32.mrf.mxu0
      %491 = vdwg.mxu0
      %v492 = vadd.f32 %v444, %v487
      %v493 = vxor.u32 %v492, 2147483648
      %v494 = vmul.f32 %v493, 1.442695
      %v495 = vpow.pop %v494
      %v496 = vadd.f32 %v495, 1.0
      %v497 = vrcp.pop %v496
      %v498 = vmul.f32 1.0, %v497
      %v499 = vtanh.pop %v492
      %v500 = vmul.f32 %v498, %v435
      %502 = vrot.lane.b32.xlu0 %v499, 64
      %v503 = vpop.permute.xlu0 %502
      %v505 = vmul.f32 %v498, %v503
      %507 = vrot.lane.b32.xlu0 %v505, 32
      %v508 = vpop.permute.xlu0 %507
      %v510 = vadd.f32 %v500, %v508
      %v511 = vtanh.pop %v510
      %513 = vrot.lane.b32.xlu0 %v511, 64
      %v514 = vpop.permute.xlu0 %513
      %v516 = vmul.f32 %v498, %v514
      %v519 = vunpack.c.l.s4 1983009808
      %v520 = vunpack.c.0.s8 %v519
      %v521 = vlaneseq
      %v522 = vshrl.u32 %v521, 7
      %v523 = vsub.s32 %v520, %v522
      %v524 = vrot.slane %v516, %v523
      %525 = vrot.lane.b32.xlu0 %v524, 32
      %v526 = vpop.permute.xlu0 %525
      %vm528 = vcmask 254976
      %529 = vst.msk [vmem:[#allocation2] sm:$0x3] %vm528, %v526
      %v532 = vunpack.c.l.s4 1983009808
      %v533 = vunpack.c.0.s8 %v532
      %v534 = vlaneseq
      %v535 = vshrl.u32 %v534, 7
      %v536 = vsub.s32 %v533, %v535
      %v537 = vrot.slane %v510, %v536
      %538 = vrot.lane.b32.xlu0 %v537, 96
      %v539 = vpop.permute.xlu0 %538
      %541 = vst.msk [vmem:[#allocation3] sm:$0x3] %vm528, %v539
      %p542 = scmp.eq.s32.totalorder %s16, 1
      // Predicated region
      $region41: #{discriminator_forward.1} parent=35 // pred_check
        %p543 = pneg %p542
      $region42: #{discriminator_forward.1} parent=35 // pred_check_branch
        %545 = sbr.rel (%p543) target = $region44
      $region43: #{discriminator_forward.1} parent=35 // pred_region
        %v546 = vld [vmem:[#allocation2] sm:$0x3]
        %v547 = vld [vmem:[%s2] sm:$0x1]
        %v549 = vlaneseq
        %v550 = vshrl.u32 %v549, 7
        %v551 = vsub.s32 0, %v550
        %v552 = vrot.slane %v547, %v551
        %v554 = vmul.f32 %v546, %v552
        %v555 = vsel %vm528, %v554, 0.0
        %556 = vadd.xlane.f32.xlu0 %v555
        %v557 = vpop.xlane.xlu0 %556
        %s558 = sld [smem:[#allocation4]]
        %v559 = vstv %s558
        %v560 = vadd.f32 %v557, %v559
        %vm561 = vcmask 1024
        %562 = vst.msk [vmem:[%s4] sm:$0x3] %vm561, %v560
      $region44: #{discriminator_forward.1} parent=35 // pred_fallthru
        _
      // Predicated region
      $region45: #{discriminator_forward.1} parent=35 // pred_check
        %p563 = pneg %p118
      $region46: #{discriminator_forward.1} parent=35 // pred_check_branch
        %565 = sbr.rel (%p563) target = $region48
      $region47: #{discriminator_forward.1} parent=35 // pred_region
        _
      $region48: #{discriminator_forward.1} parent=35 // pred_fallthru
        _
      // Predicated region
      $region49: #{discriminator_forward.1} parent=35 // pred_check
        %p566 = pneg %p118
      $region50: #{discriminator_forward.1} parent=35 // pred_check_branch
        %568 = sbr.rel (%p566) target = $region52
      $region51: #{discriminator_forward.1} parent=35 // pred_region
        _
      $region52: #{discriminator_forward.1} parent=35 // pred_fallthru
        _
    $region36: #{discriminator_forward.1} parent=5 // pred_fallthru
      _
    %p569 = scmp.le.s32.totalorder 2, %s11
    // Predicated region
    $region53: #{discriminator_forward.1} parent=5 // pred_check
      %p570 = pneg %p569
    $region54: #{discriminator_forward.1} parent=5 // pred_check_branch
      %572 = sbr.rel (%p570) target = $region56
    $region55: #{discriminator_forward.1} parent=5 // pred_region
      %s573 = ssub.s32 %s11, 2
    $region56: #{discriminator_forward.1} parent=5 // pred_fallthru
      _
  $region6: #{discriminator_forward.1} parent=0 // loop_footer
    %s15 = sadd.s32 1, %s11
  $region7: #{discriminator_forward.1} parent=0 // loop_footer_branch
    %10 = sbr.rel target = $region3
  $region8: #{discriminator_forward.1} parent=0 // loop_exit
    _

</llo_original>
